<compile_context>
chip_gen: v7x
topology: tpu7x:2x2x1
jax: 0.10.0
libtpu: 0.0.40
codegen_flags: <defaults>
</compile_context>

<pallas_src>
import math

import jax
import jax.numpy as jnp
from jax.experimental import pallas as pl
from jax.experimental.pallas import tpu as pltpu


def _cdiv(a, b):
    return -(-a // b)


def _round_up(x, m):
    return _cdiv(x, m) * m


def _tpu_hw_info():
    """(vmem_capacity_bytes, mxu_align, num_tensorcores) with safe fallbacks."""
    vmem_cap = 64 * 1024 * 1024          # conservative default (v7x per-TC)
    mxu_align, num_cores = 128, 1
    kind = ""
    try:
        kind = jax.devices()[0].device_kind.lower()
    except Exception:
        pass
    try:
        info = pltpu.get_tpu_info()
        cap = int(getattr(info, "vmem_capacity_bytes", 0) or 0)
        if cap > 0:
            vmem_cap = cap
    except Exception:
        pass
    if ("v5 lite" in kind) or ("v5e" in kind) or ("v5lite" in kind):
        mxu_align, num_cores = 128, 1     # v5e: 4x128^2 MXU, 1 TC
    elif "v6" in kind:
        mxu_align, num_cores = 256, 1     # v6e: 2x256^2 MXU, 1 TC
    elif ("v7" in kind) or ("7x" in kind):
        mxu_align, num_cores = 256, 2     # v7x: 2x256^2 MXU, 2 TC/chip
    elif ("v4" in kind) or ("v5p" in kind) or ("v5" in kind):
        mxu_align, num_cores = 128, 2     # megacore parts
    return vmem_cap, mxu_align, num_cores


def _pick_tile_cover(dim, align, cap):
    """Multiple of `align` (<= cap) minimizing (#steps, zero-pad); prefer bigger."""
    best_key, best_t = None, align
    t = align
    while t <= cap:
        steps = _cdiv(dim, t)
        key = (steps, steps * t - dim, -t)
        if best_key is None or key < best_key:
            best_key, best_t = key, t
        t += align
    return best_t


def _single_k_kernel(x_ref, w_ref, b_ref, out_ref):
    # Whole K in one block: out = x @ w + b.  No scratch, no RMW traffic.
    acc = jnp.einsum("ebi,eio->ebo", x_ref[...], w_ref[...],
                     preferred_element_type=jnp.float32)
    out_ref[...] = (acc + b_ref[...].astype(jnp.float32)).astype(out_ref.dtype)


def _tiled_k_kernel(x_ref, w_ref, b_ref, out_ref, acc_ref):
    # Block shapes: x (Eb,tm,tk), w (Eb,tk,tn), b (Eb,1,tn), out/acc (Eb,tm,tn).
    k = pl.program_id(3)
    part = jnp.einsum("ebi,eio->ebo", x_ref[...], w_ref[...],
                      preferred_element_type=jnp.float32)

    @pl.when(k == 0)
    def _first():                       # fold bias here: no zero-init pass
        acc_ref[...] = part + b_ref[...].astype(jnp.float32)

    @pl.when(k > 0)
    def _accum():
        acc_ref[...] += part

    @pl.when(k == pl.num_programs(3) - 1)
    def _store():
        out_ref[...] = acc_ref[...].astype(out_ref.dtype)


def parallel_linear(inp, weights, biases, *,
                    tm_cap=512, tn_cap=512, tk_cap=1024):
    """out[e] = biases[e] + inp[e] @ weights[e]  (== torch.baddbmm)."""
    E, B, n_in = inp.shape
    Ew, n_in_w, n_out = weights.shape
    assert Ew == E and n_in_w == n_in
    assert biases.shape == (E, 1, n_out)

    dtype = inp.dtype
    itemsize = jnp.dtype(dtype).itemsize
    sublane = {4: 8, 2: 16, 1: 32}.get(itemsize, 8)

    vmem_cap, mxu_align, num_cores = _tpu_hw_info()

    # ---- tiles -------------------------------------------------------------
    # Full-dim blocks bypass the (8,128) divisibility rule, so small/unaligned
    # dims need no padding.  Only K is zero-padded, and only when tiled.
    tm = B if B <= tm_cap else max((tm_cap // sublane) * sublane, sublane)
    if n_out <= tn_cap:
        tn = n_out
    else:
        n_align = mxu_align if tn_cap >= mxu_align else 128
        tn = max((tn_cap // n_align) * n_align, 128)
    if n_in <= tk_cap:
        tk, k_steps, k_pad = n_in, 1, 0
    else:
        k_align = mxu_align if tk_cap >= mxu_align else 128
        tk = _pick_tile_cover(n_in, k_align, max(tk_cap, k_align))
        k_steps = _cdiv(n_in, tk)
        k_pad = k_steps * tk - n_in

    m_steps = _cdiv(B, tm)
    n_steps = _cdiv(n_out, tn)

    # ---- ensemble batching (Eb) & VMEM sizing --------------------------------
    def per_member_bytes(tm_):
        b = 2 * (tm_ * tk + tk * tn + tn + tm_ * tn) * itemsize   # dbl-buffered
        if k_steps > 1:
            b += tm_ * tn * 4                                     # f32 scratch
        return b

    budget = max(vmem_cap // 4, 4 * 1024 * 1024)       # ~32MiB v5e/v6e, ~16MiB v7x
    Eb = 1
    for d in range(1, E + 1):
        if E % d == 0 and d * per_member_bytes(tm) <= budget:
            Eb = d

    # Keep every TensorCore busy on multi-core chips (v7x / megacore parts).
    if num_cores >= 2:
        while Eb > 1 and (E // Eb) * m_steps * n_steps < num_cores:
            Eb = max(d for d in range(1, Eb) if E % d == 0)
        if (E // Eb) * m_steps * n_steps < num_cores and B >= 2 * sublane:
            tm = _round_up(_cdiv(B, 2), sublane)        # split the M tile
            m_steps = _cdiv(B, tm)

    footprint = Eb * per_member_bytes(tm)
    vmem_limit = int(min(0.7 * vmem_cap,
                         max(2 * footprint, footprint + (4 << 20), 16 << 20)))

    # ---- wrapper-side padding: K only, and only when K is tiled -------------
    x, w = inp, weights
    if k_pad:
        x = jnp.pad(x, ((0, 0), (0, 0), (0, k_pad)))
        w = jnp.pad(w, ((0, 0), (0, k_pad), (0, 0)))

    out_shape = jax.ShapeDtypeStruct((E, B, n_out), dtype)

    if k_steps == 1:
        grid = (E // Eb, m_steps, n_steps)
        out = pl.pallas_call(
            _single_k_kernel,
            out_shape=out_shape,
            grid=grid,
            in_specs=[
                pl.BlockSpec((Eb, tm, tk), lambda e, m, n: (e, m, 0)),
                pl.BlockSpec((Eb, tk, tn), lambda e, m, n: (e, 0, n)),
                pl.BlockSpec((Eb, 1, tn), lambda e, m, n: (e, 0, n)),
            ],
            out_specs=pl.BlockSpec((Eb, tm, tn), lambda e, m, n: (e, m, n)),
            compiler_params=pltpu.CompilerParams(
                dimension_semantics=("parallel", "parallel", "parallel"),
                vmem_limit_bytes=vmem_limit),
        )(x, w, biases)
    else:
        grid = (E // Eb, m_steps, n_steps, k_steps)
        out = pl.pallas_call(
            _tiled_k_kernel,
            out_shape=out_shape,
            grid=grid,
            in_specs=[
                pl.BlockSpec((Eb, tm, tk), lambda e, m, n, k: (e, m, k)),
                pl.BlockSpec((Eb, tk, tn), lambda e, m, n, k: (e, k, n)),
                # bias ignores m and k -> its DMA is elided across those steps
                pl.BlockSpec((Eb, 1, tn), lambda e, m, n, k: (e, 0, n)),
            ],
            out_specs=pl.BlockSpec((Eb, tm, tn), lambda e, m, n, k: (e, m, n)),
            scratch_shapes=[pltpu.VMEM((Eb, tm, tn), jnp.float32)],
            compiler_params=pltpu.CompilerParams(
                dimension_semantics=("parallel", "parallel", "parallel",
                                     "arbitrary"),
                vmem_limit_bytes=vmem_limit),
        )(x, w, biases)

    return out


def init_parallel_linear_params(key, n_in, n_out, ensemble_size):
    """Mirror the PyTorch init: xavier_uniform_ weights (symmetric bound), zero bias."""
    bound = math.sqrt(6.0 / (n_in + n_out))
    weights = jax.random.uniform(
        key, (ensemble_size, n_in, n_out), dtype=jnp.float32,
        minval=-bound, maxval=bound)
    biases = jnp.zeros((ensemble_size, 1, n_out), dtype=jnp.float32)
    return weights, biases


def _check(E, B, n_in, n_out, key, **kw):
    k_w, k_b, k_x = jax.random.split(key, 3)
    weights, _ = init_parallel_linear_params(k_w, n_in, n_out, E)
    biases = 0.1 * jax.random.normal(k_b, (E, 1, n_out), dtype=jnp.float32)
    inp = jax.random.normal(k_x, (E, B, n_in), dtype=jnp.float32)

    out = jax.block_until_ready(parallel_linear(inp, weights, biases, **kw))

    ref = biases + jnp.einsum("ebi,eio->ebo", inp, weights)
    assert out.shape == (E, B, n_out), out.shape
    err = float(jnp.max(jnp.abs(out - ref)))
    assert jnp.allclose(out, ref, atol=1e-4, rtol=1e-5), err


if __name__ == "__main__":
    root = jax.random.PRNGKey(0)
    k0, k1, k2 = jax.random.split(root, 3)
    # Tiny per-member layers (the module's intended ensemble-MLP use):
    # single-K fast path, full-dim blocks, no 128-padding of K/N.
    _check(E=4, B=8, n_in=32, n_out=16, key=k0)
    # Unaligned B / n_out: ragged edge blocks, no wrapper pad or output slice.
    _check(E=3, B=20, n_in=160, n_out=48, key=k1)
    # Force the tiled-K accumulator path (bias folded at k==0, K zero-padded).
    _check(E=2, B=16, n_in=320, n_out=128, key=k2, tk_cap=128)
    print("KERNEL_OK")
</pallas_src>

<mosaic_0001>
module attributes {stable_mosaic.version = 11 : i64} {
  func.func @_single_k_kernel(%arg0: i32, %arg1: i32, %arg2: i32, %arg3: memref<4x8x32xf32, #tpu.memory_space<vmem>>, %arg4: memref<4x32x16xf32, #tpu.memory_space<vmem>>, %arg5: memref<4x1x16xf32, #tpu.memory_space<vmem>>, %arg6: memref<4x8x16xf32, #tpu.memory_space<vmem>>) attributes {dimension_semantics = [#tpu.dimension_semantics<parallel>, #tpu.dimension_semantics<parallel>, #tpu.dimension_semantics<parallel>], iteration_bounds = array<i64: 1, 1, 1>, scalar_prefetch = 0 : i64, scratch_operands = 0 : i64, tpu.core_type = #tpu.core_type<tc>, window_params = [{transform_indices = @transform_0, window_bounds = array<i64: 4, 8, 32>}, {transform_indices = @transform_1, window_bounds = array<i64: 4, 32, 16>}, {transform_indices = @transform_2, window_bounds = array<i64: 4, 1, 16>}, {transform_indices = @transform_3, window_bounds = array<i64: 4, 8, 16>}]} {
    %c0 = arith.constant 0 : index
    %c0_0 = arith.constant 0 : index
    %c0_1 = arith.constant 0 : index
    %0 = vector.load %arg3[%c0, %c0_0, %c0_1] : memref<4x8x32xf32, #tpu.memory_space<vmem>>, vector<4x8x32xf32>
    %c0_2 = arith.constant 0 : index
    %c0_3 = arith.constant 0 : index
    %c0_4 = arith.constant 0 : index
    %1 = vector.load %arg4[%c0_2, %c0_3, %c0_4] : memref<4x32x16xf32, #tpu.memory_space<vmem>>, vector<4x32x16xf32>
    "tpu.trace_start"() <{level = 10 : i32, message = "ebi,eio->ebo"}> : () -> ()
    %cst = arith.constant dense<0.000000e+00> : vector<4x8x16xf32>
    %2 = tpu.matmul %0, %1, %cst {dimension_numbers = #tpu.dot_dimension_numbers<[2], [1], [1], [2], [0, 0, 0, 1, 1, 2], [0], [0]>} : vector<4x8x32xf32>, vector<4x32x16xf32>, vector<4x8x16xf32> -> vector<4x8x16xf32>
    "tpu.trace_stop"() : () -> ()
    %c0_5 = arith.constant 0 : index
    %c0_6 = arith.constant 0 : index
    %c0_7 = arith.constant 0 : index
    %3 = vector.load %arg5[%c0_5, %c0_6, %c0_7] : memref<4x1x16xf32, #tpu.memory_space<vmem>>, vector<4x1x16xf32>
    %4 = vector.broadcast %3 : vector<4x1x16xf32> to vector<4x8x16xf32>
    %5 = arith.addf %2, %4 : vector<4x8x16xf32>
    %c0_8 = arith.constant 0 : index
    %c0_9 = arith.constant 0 : index
    %c0_10 = arith.constant 0 : index
    %6 = vector.load %arg6[%c0_8, %c0_9, %c0_10] : memref<4x8x16xf32, #tpu.memory_space<vmem>>, vector<4x8x16xf32>
    tpu.vector_store %arg6[%c0_8, %c0_9, %c0_10], %5 {strides = array<i32>} : memref<4x8x16xf32, #tpu.memory_space<vmem>>, vector<4x8x16xf32>,
    return
  }
  func.func @transform_0(%arg0: i32, %arg1: i32, %arg2: i32) -> (i32, i32, i32) {
    %c0_i32 = arith.constant 0 : i32
    %c0_i32_0 = arith.constant 0 : i32
    return %arg0, %arg1, %c0_i32 : i32, i32, i32
  }
  func.func @transform_1(%arg0: i32, %arg1: i32, %arg2: i32) -> (i32, i32, i32) {
    %c0_i32 = arith.constant 0 : i32
    %c0_i32_0 = arith.constant 0 : i32
    return %arg0, %c0_i32, %arg2 : i32, i32, i32
  }
  func.func @transform_2(%arg0: i32, %arg1: i32, %arg2: i32) -> (i32, i32, i32) {
    %c0_i32 = arith.constant 0 : i32
    %c0_i32_0 = arith.constant 0 : i32
    return %arg0, %c0_i32, %arg2 : i32, i32, i32
  }
  func.func @transform_3(%arg0: i32, %arg1: i32, %arg2: i32) -> (i32, i32, i32) {
    %c0_i32 = arith.constant 0 : i32
    return %arg0, %arg1, %arg2 : i32, i32, i32
  }
}

</mosaic_0001>

<llo_original>
// kernel: tpu_custom_call.1
$region0: #{tpu_custom_call.1}
  #allocation0 [shape = 'u32[]', space=smem, size = 0x4, offset = 0x4, fixed_abs, tag = 'smem constant byte address 0x4 - core index']
  #allocation1 [shape = 'u32[144,128]{1,0:T(1,128)}', space=vmem, size = 0x12000, scoped, tag = 'internal scratch']
  %s0 = inlined_call_operand.vmem [shape: f32[4,8,32], index: 0, kind: input, shape index: {}]
  %s1 = inlined_call_operand.vmem [shape: f32[4,32,16], index: 1, kind: input, shape index: {}]
  %s2 = inlined_call_operand.vmem [shape: f32[4,1,16], index: 2, kind: input, shape index: {}]
  %s3 = inlined_call_operand.hbm [shape: f32[4,8,16], index: 3, kind: output, shape index: {}]
  %s4 = sld [smem:[#allocation0]]
  $region22: #{tpu_custom_call.1} parent=0
    _
  %s6 = ssub.s32 1, %s4
  %s7 = scalar_select 0, %s6, %s4
  $region1: #{tpu_custom_call.1} parent=0
    #allocation2 [shape = 'u8[16384]{0}', space=vmem, size = 0x4000, scoped, tag = 'output window, operand 0, single buffered']
    #allocation3 [shape = 's32[1]{0}', space=sflag, size = 0x4, scoped, tag = 'scoped memory for tpu_custom_call.1']
    %8 = vsyncpa [#allocation3], 0
    // Predicated region
    $region2: #{tpu_custom_call.1} parent=1 // pred_check
      _
    $region3: #{tpu_custom_call.1} parent=1 // pred_check_branch
      %10 = sbr.rel (0) target = $region5
    $region4: #{tpu_custom_call.1} parent=1 // pred_region
      _
    $region5: #{tpu_custom_call.1} parent=1 // pred_fallthru
      _
    // Predicated region
    $region6: #{tpu_custom_call.1} parent=1 // pred_check
      _
    $region7: #{tpu_custom_call.1} parent=1 // pred_check_branch
      %12 = sbr.rel (0) target = $region9
    $region8: #{tpu_custom_call.1} parent=1 // pred_region
      _
    $region9: #{tpu_custom_call.1} parent=1 // pred_fallthru
      _
    // Predicated region
    $region10: #{tpu_custom_call.1} parent=1 // pred_check
      _
    $region11: #{tpu_custom_call.1} parent=1 // pred_check_branch
      %14 = sbr.rel (0) target = $region13
    $region12: #{tpu_custom_call.1} parent=1 // pred_region
      _
    $region13: #{tpu_custom_call.1} parent=1 // pred_fallthru
      _
    %v15 = vld [vmem:[%s0] sm:$0xff]
    %v16 = vld [vmem:[%s0 + $0x8] sm:$0xff]
    %v17 = vld [vmem:[%s0 + $0x10] sm:$0xff]
    %v18 = vld [vmem:[%s0 + $0x18] sm:$0xff]
    %v19 = vld [vmem:[%s1] sm:$0xff]
    %v20 = vld [vmem:[%s1 + $0x8] sm:$0xff]
    %v21 = vld [vmem:[%s1 + $0x10] sm:$0xff]
    %v22 = vld [vmem:[%s1 + $0x18] sm:$0xff]
    %v23 = vld [vmem:[%s1 + $0x20] sm:$0xff]
    %v24 = vld [vmem:[%s1 + $0x28] sm:$0xff]
    %v25 = vld [vmem:[%s1 + $0x30] sm:$0xff]
    %v26 = vld [vmem:[%s1 + $0x38] sm:$0xff]
    %v27 = vld [vmem:[%s1 + $0x40] sm:$0xff]
    %v28 = vld [vmem:[%s1 + $0x48] sm:$0xff]
    %v29 = vld [vmem:[%s1 + $0x50] sm:$0xff]
    %v30 = vld [vmem:[%s1 + $0x58] sm:$0xff]
    %v31 = vld [vmem:[%s1 + $0x60] sm:$0xff]
    %v32 = vld [vmem:[%s1 + $0x68] sm:$0xff]
    %v33 = vld [vmem:[%s1 + $0x70] sm:$0xff]
    %v34 = vld [vmem:[%s1 + $0x78] sm:$0xff]
    %v35 = vld [vmem:[%s2] sm:$0x1]
    %v36 = vld [vmem:[%s2 + $0x1] sm:$0x1]
    %v37 = vld [vmem:[%s2 + $0x2] sm:$0x1]
    %v38 = vld [vmem:[%s2 + $0x3] sm:$0x1]
    %v43 = vlaneseq
    %v44 = vshrl.u32 %v43, 7
    %v45 = vsub.s32 0, %v44
    %v46 = vrot.slane %v35, %v45
    %v47 = vlaneseq
    %v48 = vshrl.u32 %v47, 7
    %v49 = vsub.s32 0, %v48
    %v50 = vrot.slane %v36, %v49
    %v51 = vlaneseq
    %v52 = vshrl.u32 %v51, 7
    %v53 = vsub.s32 0, %v52
    %v54 = vrot.slane %v37, %v53
    %v55 = vlaneseq
    %v56 = vshrl.u32 %v55, 7
    %v57 = vsub.s32 0, %v56
    %v58 = vrot.slane %v38, %v57
    %vm63 = vcmask 261120
    %v65 = vsel %vm63, %v15, 0
    %67 = vmatprep.subr.mxu0 0.0
    %68 = vmatpush1.msra.mxu0 %v19
    %69 = vmatprep.subr.mxu0 0.0
    %70 = vmatpush1.msra.mxu0 %v20
    %71 = vmatprep.subr.mxu0 0.0
    %72 = vmatpush1.msra.mxu0 %v21
    %73 = vmatprep.subr.mxu0 0.0
    %74 = vmatpush1.msra.mxu0 %v22
    %75 = vmatprep.subr.mxu0 0.0
    %76 = vmatpush1.msra.mxu0 0.0
    %77 = vmatprep.subr.mxu0 0.0
    %78 = vmatpush1.msra.mxu0 0.0
    %79 = vmatprep.subr.mxu0 0.0
    %80 = vmatpush1.msra.mxu0 0.0
    %81 = vmatprep.subr.mxu0 0.0
    %82 = vmatpush1.msra.mxu0 0.0
    %83 = vmatprep.subr.mxu0 0.0
    %84 = vmatpush1.msra.mxu0 0.0
    %85 = vmatprep.subr.mxu0 0.0
    %86 = vmatpush1.msra.mxu0 0.0
    %87 = vmatprep.subr.mxu0 0.0
    %88 = vmatpush1.msra.mxu0 0.0
    %89 = vmatprep.subr.mxu0 0.0
    %90 = vmatpush1.msra.mxu0 0.0
    %91 = vmatprep.subr.mxu0 0.0
    %92 = vmatpush1.msra.mxu0 0.0
    %93 = vmatprep.subr.mxu0 0.0
    %94 = vmatpush1.msra.mxu0 0.0
    %95 = vmatprep.subr.mxu0 0.0
    %96 = vmatpush1.msra.mxu0 0.0
    %97 = vmatprep.subr.mxu0 0.0
    %98 = vmatpush1.msra.mxu0 0.0
    %99 = vmatprep.subr.mxu0 0.0
    %100 = vmatpush1.msra.mxu0 0.0
    %101 = vmatprep.subr.mxu0 0.0
    %102 = vmatpush1.msra.mxu0 0.0
    %103 = vmatprep.subr.mxu0 0.0
    %104 = vmatpush1.msra.mxu0 0.0
    %105 = vmatprep.subr.mxu0 0.0
    %106 = vmatpush1.msra.mxu0 0.0
    %107 = vmatprep.subr.mxu0 0.0
    %108 = vmatpush1.msra.mxu0 0.0
    %109 = vmatprep.subr.mxu0 0.0
    %110 = vmatpush1.msra.mxu0 0.0
    %111 = vmatprep.subr.mxu0 0.0
    %112 = vmatpush1.msra.mxu0 0.0
    %113 = vmatprep.subr.mxu0 0.0
    %114 = vmatpush1.msra.mxu0 0.0
    %115 = vmatprep.subr.mxu0 0.0
    %116 = vmatpush1.msra.mxu0 0.0
    %117 = vmatprep.subr.mxu0 0.0
    %118 = vmatpush1.msra.mxu0 0.0
    %119 = vmatprep.subr.mxu0 0.0
    %120 = vmatpush1.msra.mxu0 0.0
    %121 = vmatprep.subr.mxu0 0.0
    %122 = vmatpush1.msra.mxu0 0.0
    %123 = vmatprep.subr.mxu0 0.0
    %124 = vmatpush1.msra.mxu0 0.0
    %125 = vmatprep.subr.mxu0 0.0
    %126 = vmatpush1.msra.mxu0 0.0
    %127 = vmatprep.subr.mxu0 0.0
    %128 = vmatpush1.msra.mxu0 0.0
    %129 = vmatprep.subr.mxu0 0.0
    %130 = vmatpush1.msra.mxu0 0.0
    %131 = vmatprep.mubr.f32.mxu0 0.0
    %132 = vmatmul.mubr.f32.gmra.mrb[0].mxu0 %v65
    %v133 = vpop.f32.mrb[0].mxu0
    %v134 = vadd.f32 %v46, %v133
    %v135 = vpop.f32.mrb[0].mxu0
    %136 = vdwg.mxu0
    %v138 = vsel %vm63, %v16, 0
    %140 = vmatprep.subr.mxu0 0.0
    %141 = vmatpush1.msra.mxu0 %v23
    %142 = vmatprep.subr.mxu0 0.0
    %143 = vmatpush1.msra.mxu0 %v24
    %144 = vmatprep.subr.mxu0 0.0
    %145 = vmatpush1.msra.mxu0 %v25
    %146 = vmatprep.subr.mxu0 0.0
    %147 = vmatpush1.msra.mxu0 %v26
    %148 = vmatprep.subr.mxu0 0.0
    %149 = vmatpush1.msra.mxu0 0.0
    %150 = vmatprep.subr.mxu0 0.0
    %151 = vmatpush1.msra.mxu0 0.0
    %152 = vmatprep.subr.mxu0 0.0
    %153 = vmatpush1.msra.mxu0 0.0
    %154 = vmatprep.subr.mxu0 0.0
    %155 = vmatpush1.msra.mxu0 0.0
    %156 = vmatprep.subr.mxu0 0.0
    %157 = vmatpush1.msra.mxu0 0.0
    %158 = vmatprep.subr.mxu0 0.0
    %159 = vmatpush1.msra.mxu0 0.0
    %160 = vmatprep.subr.mxu0 0.0
    %161 = vmatpush1.msra.mxu0 0.0
    %162 = vmatprep.subr.mxu0 0.0
    %163 = vmatpush1.msra.mxu0 0.0
    %164 = vmatprep.subr.mxu0 0.0
    %165 = vmatpush1.msra.mxu0 0.0
    %166 = vmatprep.subr.mxu0 0.0
    %167 = vmatpush1.msra.mxu0 0.0
    %168 = vmatprep.subr.mxu0 0.0
    %169 = vmatpush1.msra.mxu0 0.0
    %170 = vmatprep.subr.mxu0 0.0
    %171 = vmatpush1.msra.mxu0 0.0
    %172 = vmatprep.subr.mxu0 0.0
    %173 = vmatpush1.msra.mxu0 0.0
    %174 = vmatprep.subr.mxu0 0.0
    %175 = vmatpush1.msra.mxu0 0.0
    %176 = vmatprep.subr.mxu0 0.0
    %177 = vmatpush1.msra.mxu0 0.0
    %178 = vmatprep.subr.mxu0 0.0
    %179 = vmatpush1.msra.mxu0 0.0
    %180 = vmatprep.subr.mxu0 0.0
    %181 = vmatpush1.msra.mxu0 0.0
    %182 = vmatprep.subr.mxu0 0.0
    %183 = vmatpush1.msra.mxu0 0.0
    %184 = vmatprep.subr.mxu0 0.0
    %185 = vmatpush1.msra.mxu0 0.0
    %186 = vmatprep.subr.mxu0 0.0
    %187 = vmatpush1.msra.mxu0 0.0
    %188 = vmatprep.subr.mxu0 0.0
    %189 = vmatpush1.msra.mxu0 0.0
    %190 = vmatprep.subr.mxu0 0.0
    %191 = vmatpush1.msra.mxu0 0.0
    %192 = vmatprep.subr.mxu0 0.0
    %193 = vmatpush1.msra.mxu0 0.0
    %194 = vmatprep.subr.mxu0 0.0
    %195 = vmatpush1.msra.mxu0 0.0
    %196 = vmatprep.subr.mxu0 0.0
    %197 = vmatpush1.msra.mxu0 0.0
    %198 = vmatprep.subr.mxu0 0.0
    %199 = vmatpush1.msra.mxu0 0.0
    %200 = vmatprep.subr.mxu0 0.0
    %201 = vmatpush1.msra.mxu0 0.0
    %202 = vmatprep.subr.mxu0 0.0
    %203 = vmatpush1.msra.mxu0 0.0
    %204 = vmatprep.mubr.f32.mxu0 0.0
    %205 = vmatmul.mubr.f32.gmra.mrb[0].mxu0 %v138
    %v206 = vpop.f32.mrb[0].mxu0
    %v207 = vadd.f32 %v50, %v206
    %v208 = vpop.f32.mrb[0].mxu0
    %209 = vdwg.mxu0
    %v211 = vsel %vm63, %v17, 0
    %213 = vmatprep.subr.mxu0 0.0
    %214 = vmatpush1.msra.mxu0 %v27
    %215 = vmatprep.subr.mxu0 0.0
    %216 = vmatpush1.msra.mxu0 %v28
    %217 = vmatprep.subr.mxu0 0.0
    %218 = vmatpush1.msra.mxu0 %v29
    %219 = vmatprep.subr.mxu0 0.0
    %220 = vmatpush1.msra.mxu0 %v30
    %221 = vmatprep.subr.mxu0 0.0
    %222 = vmatpush1.msra.mxu0 0.0
    %223 = vmatprep.subr.mxu0 0.0
    %224 = vmatpush1.msra.mxu0 0.0
    %225 = vmatprep.subr.mxu0 0.0
    %226 = vmatpush1.msra.mxu0 0.0
    %227 = vmatprep.subr.mxu0 0.0
    %228 = vmatpush1.msra.mxu0 0.0
    %229 = vmatprep.subr.mxu0 0.0
    %230 = vmatpush1.msra.mxu0 0.0
    %231 = vmatprep.subr.mxu0 0.0
    %232 = vmatpush1.msra.mxu0 0.0
    %233 = vmatprep.subr.mxu0 0.0
    %234 = vmatpush1.msra.mxu0 0.0
    %235 = vmatprep.subr.mxu0 0.0
    %236 = vmatpush1.msra.mxu0 0.0
    %237 = vmatprep.subr.mxu0 0.0
    %238 = vmatpush1.msra.mxu0 0.0
    %239 = vmatprep.subr.mxu0 0.0
    %240 = vmatpush1.msra.mxu0 0.0
    %241 = vmatprep.subr.mxu0 0.0
    %242 = vmatpush1.msra.mxu0 0.0
    %243 = vmatprep.subr.mxu0 0.0
    %244 = vmatpush1.msra.mxu0 0.0
    %245 = vmatprep.subr.mxu0 0.0
    %246 = vmatpush1.msra.mxu0 0.0
    %247 = vmatprep.subr.mxu0 0.0
    %248 = vmatpush1.msra.mxu0 0.0
    %249 = vmatprep.subr.mxu0 0.0
    %250 = vmatpush1.msra.mxu0 0.0
    %251 = vmatprep.subr.mxu0 0.0
    %252 = vmatpush1.msra.mxu0 0.0
    %253 = vmatprep.subr.mxu0 0.0
    %254 = vmatpush1.msra.mxu0 0.0
    %255 = vmatprep.subr.mxu0 0.0
    %256 = vmatpush1.msra.mxu0 0.0
    %257 = vmatprep.subr.mxu0 0.0
    %258 = vmatpush1.msra.mxu0 0.0
    %259 = vmatprep.subr.mxu0 0.0
    %260 = vmatpush1.msra.mxu0 0.0
    %261 = vmatprep.subr.mxu0 0.0
    %262 = vmatpush1.msra.mxu0 0.0
    %263 = vmatprep.subr.mxu0 0.0
    %264 = vmatpush1.msra.mxu0 0.0
    %265 = vmatprep.subr.mxu0 0.0
    %266 = vmatpush1.msra.mxu0 0.0
    %267 = vmatprep.subr.mxu0 0.0
    %268 = vmatpush1.msra.mxu0 0.0
    %269 = vmatprep.subr.mxu0 0.0
    %270 = vmatpush1.msra.mxu0 0.0
    %271 = vmatprep.subr.mxu0 0.0
    %272 = vmatpush1.msra.mxu0 0.0
    %273 = vmatprep.subr.mxu0 0.0
    %274 = vmatpush1.msra.mxu0 0.0
    %275 = vmatprep.subr.mxu0 0.0
    %276 = vmatpush1.msra.mxu0 0.0
    %277 = vmatprep.mubr.f32.mxu0 0.0
    %278 = vmatmul.mubr.f32.gmra.mrb[0].mxu0 %v211
    %v279 = vpop.f32.mrb[0].mxu0
    %v280 = vadd.f32 %v54, %v279
    %v281 = vpop.f32.mrb[0].mxu0
    %282 = vdwg.mxu0
    %v284 = vsel %vm63, %v18, 0
    %286 = vmatprep.subr.mxu0 0.0
    %287 = vmatpush1.msra.mxu0 %v31
    %288 = vmatprep.subr.mxu0 0.0
    %289 = vmatpush1.msra.mxu0 %v32
    %290 = vmatprep.subr.mxu0 0.0
    %291 = vmatpush1.msra.mxu0 %v33
    %292 = vmatprep.subr.mxu0 0.0
    %293 = vmatpush1.msra.mxu0 %v34
    %294 = vmatprep.subr.mxu0 0.0
    %295 = vmatpush1.msra.mxu0 0.0
    %296 = vmatprep.subr.mxu0 0.0
    %297 = vmatpush1.msra.mxu0 0.0
    %298 = vmatprep.subr.mxu0 0.0
    %299 = vmatpush1.msra.mxu0 0.0
    %300 = vmatprep.subr.mxu0 0.0
    %301 = vmatpush1.msra.mxu0 0.0
    %302 = vmatprep.subr.mxu0 0.0
    %303 = vmatpush1.msra.mxu0 0.0
    %304 = vmatprep.subr.mxu0 0.0
    %305 = vmatpush1.msra.mxu0 0.0
    %306 = vmatprep.subr.mxu0 0.0
    %307 = vmatpush1.msra.mxu0 0.0
    %308 = vmatprep.subr.mxu0 0.0
    %309 = vmatpush1.msra.mxu0 0.0
    %310 = vmatprep.subr.mxu0 0.0
    %311 = vmatpush1.msra.mxu0 0.0
    %312 = vmatprep.subr.mxu0 0.0
    %313 = vmatpush1.msra.mxu0 0.0
    %314 = vmatprep.subr.mxu0 0.0
    %315 = vmatpush1.msra.mxu0 0.0
    %316 = vmatprep.subr.mxu0 0.0
    %317 = vmatpush1.msra.mxu0 0.0
    %318 = vmatprep.subr.mxu0 0.0
    %319 = vmatpush1.msra.mxu0 0.0
    %320 = vmatprep.subr.mxu0 0.0
    %321 = vmatpush1.msra.mxu0 0.0
    %322 = vmatprep.subr.mxu0 0.0
    %323 = vmatpush1.msra.mxu0 0.0
    %324 = vmatprep.subr.mxu0 0.0
    %325 = vmatpush1.msra.mxu0 0.0
    %326 = vmatprep.subr.mxu0 0.0
    %327 = vmatpush1.msra.mxu0 0.0
    %328 = vmatprep.subr.mxu0 0.0
    %329 = vmatpush1.msra.mxu0 0.0
    %330 = vmatprep.subr.mxu0 0.0
    %331 = vmatpush1.msra.mxu0 0.0
    %332 = vmatprep.subr.mxu0 0.0
    %333 = vmatpush1.msra.mxu0 0.0
    %334 = vmatprep.subr.mxu0 0.0
    %335 = vmatpush1.msra.mxu0 0.0
    %336 = vmatprep.subr.mxu0 0.0
    %337 = vmatpush1.msra.mxu0 0.0
    %338 = vmatprep.subr.mxu0 0.0
    %339 = vmatpush1.msra.mxu0 0.0
    %340 = vmatprep.subr.mxu0 0.0
    %341 = vmatpush1.msra.mxu0 0.0
    %342 = vmatprep.subr.mxu0 0.0
    %343 = vmatpush1.msra.mxu0 0.0
    %344 = vmatprep.subr.mxu0 0.0
    %345 = vmatpush1.msra.mxu0 0.0
    %346 = vmatprep.subr.mxu0 0.0
    %347 = vmatpush1.msra.mxu0 0.0
    %348 = vmatprep.subr.mxu0 0.0
    %349 = vmatpush1.msra.mxu0 0.0
    %350 = vmatprep.mubr.f32.mxu0 0.0
    %351 = vmatmul.mubr.f32.gmra.mrb[0].mxu0 %v284
    %v352 = vpop.f32.mrb[0].mxu0
    %v353 = vadd.f32 %v58, %v352
    %v354 = vpop.f32.mrb[0].mxu0
    %355 = vdwg.mxu0
    %vm356 = vcmask 130048
    %357 = vst.msk [vmem:[#allocation2] sm:$0xff] %vm356, %v134
    %358 = vst.msk [vmem:[#allocation2 + $0x8] sm:$0xff] %vm356, %v207
    %359 = vst.msk [vmem:[#allocation2 + $0x10] sm:$0xff] %vm356, %v280
    %360 = vst.msk [vmem:[#allocation2 + $0x18] sm:$0xff] %vm356, %v353
    // Predicated region
    $region14: #{tpu_custom_call.1} parent=1 // pred_check
      _
    $region15: #{tpu_custom_call.1} parent=1 // pred_check_branch
      %362 = sbr.rel (0) target = $region17
    $region16: #{tpu_custom_call.1} parent=1 // pred_region
      %s364 = ssub.s32 512, 512
      %365 = vsyncadd [#allocation3], %s364
      %s366 = sshll.u32 [#allocation2], 4
      %s367 = int_to_ptr.vmem [resolvable:$true] %s366
      %372 = dma.vmem_to_hbm [thread:$0]  %s367, 512, %s3, [#allocation3], 128, 128, 8
    $region17: #{tpu_custom_call.1} parent=1 // pred_fallthru
      _
    // Predicated region
    $region18: #{tpu_custom_call.1} parent=1 // pred_check
      _
    $region19: #{tpu_custom_call.1} parent=1 // pred_check_branch
      %374 = sbr.rel (0) target = $region21
    $region20: #{tpu_custom_call.1} parent=1 // pred_region
      %375 = dma.done [#allocation3], 512
    $region21: #{tpu_custom_call.1} parent=1 // pred_fallthru
      _
    %376 = vsyncpa [#allocation3], 1

</llo_original>
